<compile_context>
chip_gen: v7x
topology: tpu7x:2x2x1
jax: 0.10.0
libtpu: 0.0.40
codegen_flags: <defaults>
</compile_context>

<pallas_src>
import jax
import jax.numpy as jnp
from jax import lax
from jax.experimental import pallas as pl
from jax.experimental.pallas import tpu as pltpu

LANE = 512            # lane-dense last dim (multiple of 128)
MAX_TILE_ROWS = 512   # sublane rows per tile (multiple of 8) -> 1 MiB f32 / input tile
NCORES = 2            # leading "parallel" grid axis (sharded across TCs on v7x)


def _make_kernel(rows, block_rows, steps_per_core, need_row_mask):
    """Build the reduction kernel for a (rows, LANE) slab."""

    def kernel(pred_ref, target_ref, sum_ref, cnt_ref, acc_sq, acc_cnt):
        i = pl.program_id(0)          # parallel (core) axis
        k = pl.program_id(1)          # reduction axis

        @pl.when(k == 0)
        def _():
            acc_sq[...] = jnp.zeros_like(acc_sq)
            acc_cnt[...] = jnp.zeros_like(acc_cnt)

        p = pred_ref[...]
        t = target_ref[...]
        valid = t > 0.0
        if need_row_mask:
            # Logical (unclamped) step; rows outside the slab (partial last
            # tile, or duplicate clamped tiles) are masked out here.
            step = i * steps_per_core + k
            row0 = step * block_rows
            row_idx = row0 + lax.broadcasted_iota(
                jnp.int32, (block_rows, LANE), 0)
            valid = jnp.logical_and(valid, row_idx < rows)

        # 1/p - 1/t == (t - p) / (p * t): one divide instead of two.
        # Masked-out lanes may produce inf/NaN in the unselected branch;
        # jnp.where *selects*, so they never leak into the result.
        diff = jnp.where(valid, (t - p) / (p * t), 0.0)

        # Elementwise (VALU-only) accumulation each step; the expensive
        # cross-lane reduce happens once, below.
        acc_sq[...] += diff * diff
        acc_cnt[...] += valid.astype(jnp.float32)

        @pl.when(k == pl.num_programs(1) - 1)
        def _():
            # Note: count is exact per-element; the single final f32 reduce is
            # exact up to 2^24 valid pixels (~16.7M), ample for depth maps.
            sum_ref[...] = jnp.full((1, 8, 128), jnp.sum(acc_sq[...]),
                                    dtype=jnp.float32)
            cnt_ref[...] = jnp.full((1, 8, 128), jnp.sum(acc_cnt[...]),
                                    dtype=jnp.float32)

    return kernel


def _masked_reduce(pred2, target2):
    """Per-core partial (sum of squared inv-diff, valid count) over a slab."""
    rows = pred2.shape[0]
    block_rows = rows if rows < MAX_TILE_ROWS else MAX_TILE_ROWS
    total_steps = pl.cdiv(rows, block_rows)
    steps_per_core = pl.cdiv(total_steps, NCORES)
    # Mask needed whenever the logical (core x step x block) range over-covers
    # the slab (partial last block and/or padded logical steps).
    need_row_mask = (NCORES * steps_per_core * block_rows) != rows

    def in_map(i, k):
        step = jnp.minimum(i * steps_per_core + k, total_steps - 1)
        return (step, 0)

    in_spec = pl.BlockSpec((block_rows, LANE), in_map)
    out_spec = pl.BlockSpec((1, 8, 128), lambda i, k: (i, 0, 0))

    kernel = _make_kernel(rows, block_rows, steps_per_core, need_row_mask)

    part_sq, part_cnt = pl.pallas_call(
        kernel,
        out_shape=(
            jax.ShapeDtypeStruct((NCORES, 8, 128), jnp.float32),
            jax.ShapeDtypeStruct((NCORES, 8, 128), jnp.float32),
        ),
        grid=(NCORES, steps_per_core),
        in_specs=[in_spec, in_spec],
        out_specs=(out_spec, out_spec),
        scratch_shapes=[
            pltpu.VMEM((block_rows, LANE), jnp.float32),  # acc_sq
            pltpu.VMEM((block_rows, LANE), jnp.float32),  # acc_cnt
        ],
        compiler_params=pltpu.CompilerParams(
            dimension_semantics=("parallel", "arbitrary"),
        ),
    )(pred2, target2)
    return part_sq, part_cnt


@jax.jit
def inv_rmse(pred, target):
    """JAX/Pallas equivalent of InvRMSE.forward. Returns a scalar f32.

    Returns -1.0 when the number of valid pixels (target > 0) is < 10,
    otherwise sqrt(mean((1/pred - 1/target)^2 over valid pixels)).
    """
    pred = pred.astype(jnp.float32).reshape(-1)
    target = target.astype(jnp.float32).reshape(-1)
    n = pred.shape[0]                      # static at trace time

    if n % LANE != 0:
        # Rare path: pad only the tail up to a lane multiple.
        pad = LANE - (n % LANE)
        pred = jnp.pad(pred, (0, pad), constant_values=1.0)     # safe divisor
        target = jnp.pad(target, (0, pad), constant_values=0.0)  # invalid
    rows = pred.shape[0] // LANE

    part_sq, part_cnt = _masked_reduce(pred.reshape(rows, LANE),
                                       target.reshape(rows, LANE))

    sum_sq = jnp.sum(part_sq[:, 0, 0])     # combine per-core partials
    count = jnp.sum(part_cnt[:, 0, 0])

    rmse = jnp.sqrt(sum_sq / jnp.maximum(count, 1.0))
    # TODO(synk): PyTorch early-returns the Python int -1 via .item(); here we
    # return a device scalar (-1.0) selected with jnp.where instead.
    return jnp.where(count < 10.0, jnp.float32(-1.0), rmse)


def _reference(pred, target):
    """Pure-JAX reference of the PyTorch module for verification."""
    mask = target > 0
    n = jnp.sum(mask)
    diff = jnp.where(mask, 1.0 / pred - 1.0 / target, 0.0)
    rmse = jnp.sqrt(jnp.sum(diff * diff) / jnp.maximum(n, 1))
    return jnp.where(n < 10, -1.0, rmse)


if __name__ == "__main__":
    key = jax.random.PRNGKey(0)

    def make_inputs(k, shape, invalid_frac=0.3):
        k1, k2, k3 = jax.random.split(k, 3)
        pred = jax.random.uniform(k1, shape, jnp.float32, 0.5, 5.0)
        target = jax.random.uniform(k2, shape, jnp.float32, 0.5, 5.0)
        invalid = jax.random.uniform(k3, shape) < invalid_frac
        return pred, jnp.where(invalid, 0.0, target)

    k0, k1, k2 = jax.random.split(key, 3)

    # Primary small NCHW case (B=2, C=4, H=16, W=16).
    pred, target = make_inputs(k0, (2, 4, 16, 16))
    out = jax.block_until_ready(inv_rmse(pred, target))
    ref = _reference(pred, target)
    assert jnp.allclose(out, ref, rtol=1e-4, atol=1e-6), (out, ref)

    # "< 10 valid pixels" branch.
    out_empty = jax.block_until_ready(inv_rmse(pred, jnp.zeros_like(target)))
    assert jnp.allclose(out_empty, -1.0), out_empty

    # Odd shape exercising the lane-padding path.
    pred_o, target_o = make_inputs(k1, (1, 1, 13, 17))
    out_o = jax.block_until_ready(inv_rmse(pred_o, target_o))
    ref_o = _reference(pred_o, target_o)
    assert jnp.allclose(out_o, ref_o, rtol=1e-4, atol=1e-6), (out_o, ref_o)

    # Larger map exercising multi-step grid, partial last tile and 2-way split.
    pred_l, target_l = make_inputs(k2, (1, 1, 824, 640))
    out_l = jax.block_until_ready(inv_rmse(pred_l, target_l))
    ref_l = _reference(pred_l, target_l)
    assert jnp.allclose(out_l, ref_l, rtol=1e-4, atol=1e-6), (out_l, ref_l)

    print("KERNEL_OK")
</pallas_src>

<mosaic_0001>
module attributes {stable_mosaic.version = 11 : i64} {
  func.func @kernel(%arg0: i32, %arg1: i32, %arg2: memref<4x512xf32, #tpu.memory_space<vmem>>, %arg3: memref<4x512xf32, #tpu.memory_space<vmem>>, %arg4: memref<1x8x128xf32, #tpu.memory_space<vmem>>, %arg5: memref<1x8x128xf32, #tpu.memory_space<vmem>>, %arg6: memref<4x512xf32, #tpu.memory_space<vmem>>, %arg7: memref<4x512xf32, #tpu.memory_space<vmem>>) attributes {dimension_semantics = [#tpu.dimension_semantics<parallel>, #tpu.dimension_semantics<arbitrary>], iteration_bounds = array<i64: 2, 1>, scalar_prefetch = 0 : i64, scratch_operands = 2 : i64, tpu.core_type = #tpu.core_type<tc>, window_params = [{transform_indices = @transform_0, window_bounds = array<i64: 4, 512>}, {transform_indices = @transform_1, window_bounds = array<i64: 4, 512>}, {transform_indices = @transform_2, window_bounds = array<i64: 1, 8, 128>}, {transform_indices = @transform_3, window_bounds = array<i64: 1, 8, 128>}]} {
    %c0_i32 = arith.constant 0 : i32
    %0 = arith.cmpi eq, %arg1, %c0_i32 : i32
    %1 = arith.extui %0 : i1 to i32
    %c0_i32_0 = arith.constant 0 : i32
    %2 = arith.cmpi ne, %1, %c0_i32_0 : i32
    scf.if %2 {
      %cst_16 = arith.constant 0.000000e+00 : f32
      %33 = vector.broadcast %cst_16 : f32 to vector<4x512xf32>
      %c0_17 = arith.constant 0 : index
      %c0_18 = arith.constant 0 : index
      %34 = vector.load %arg6[%c0_17, %c0_18] : memref<4x512xf32, #tpu.memory_space<vmem>>, vector<4x512xf32>
      tpu.vector_store %arg6[%c0_17, %c0_18], %33 {strides = array<i32>} : memref<4x512xf32, #tpu.memory_space<vmem>>, vector<4x512xf32>,
      %cst_19 = arith.constant 0.000000e+00 : f32
      %35 = vector.broadcast %cst_19 : f32 to vector<4x512xf32>
      %c0_20 = arith.constant 0 : index
      %c0_21 = arith.constant 0 : index
      %36 = vector.load %arg7[%c0_20, %c0_21] : memref<4x512xf32, #tpu.memory_space<vmem>>, vector<4x512xf32>
      tpu.vector_store %arg7[%c0_20, %c0_21], %35 {strides = array<i32>} : memref<4x512xf32, #tpu.memory_space<vmem>>, vector<4x512xf32>,
    } else {
    }
    %c0 = arith.constant 0 : index
    %c0_1 = arith.constant 0 : index
    %3 = vector.load %arg2[%c0, %c0_1] : memref<4x512xf32, #tpu.memory_space<vmem>>, vector<4x512xf32>
    %c0_2 = arith.constant 0 : index
    %c0_3 = arith.constant 0 : index
    %4 = vector.load %arg3[%c0_2, %c0_3] : memref<4x512xf32, #tpu.memory_space<vmem>>, vector<4x512xf32>
    %cst = arith.constant 0.000000e+00 : f32
    %5 = vector.broadcast %cst : f32 to vector<4x512xf32>
    %6 = arith.cmpf ogt, %4, %5 : vector<4x512xf32>
    %c1_i32 = arith.constant 1 : i32
    %7 = arith.muli %arg0, %c1_i32 : i32
    %8 = arith.addi %7, %arg1 : i32
    %c4_i32 = arith.constant 4 : i32
    %9 = arith.muli %8, %c4_i32 : i32
    %10 = tpu.iota {dimensions = array<i32: 0>} : vector<4x512xi32>
    %11 = vector.broadcast %9 : i32 to vector<4x512xi32>
    %12 = arith.addi %11, %10 : vector<4x512xi32>
    %c4_i32_4 = arith.constant 4 : i32
    %13 = vector.broadcast %c4_i32_4 : i32 to vector<4x512xi32>
    %14 = arith.cmpi slt, %12, %13 : vector<4x512xi32>
    %15 = arith.andi %6, %14 : vector<4x512xi1>
    %16 = arith.subf %4, %3 : vector<4x512xf32>
    %17 = arith.mulf %3, %4 : vector<4x512xf32>
    %18 = arith.divf %16, %17 : vector<4x512xf32>
    %cst_5 = arith.constant 0.000000e+00 : f32
    %19 = vector.broadcast %cst_5 : f32 to vector<4x512xf32>
    %20 = arith.select %15, %18, %19 : vector<4x512xi1>, vector<4x512xf32>
    %c0_6 = arith.constant 0 : index
    %c0_7 = arith.constant 0 : index
    %21 = vector.load %arg6[%c0_6, %c0_7] : memref<4x512xf32, #tpu.memory_space<vmem>>, vector<4x512xf32>
    %22 = arith.mulf %20, %20 : vector<4x512xf32>
    %23 = arith.addf %21, %22 : vector<4x512xf32>
    %c0_8 = arith.constant 0 : index
    %c0_9 = arith.constant 0 : index
    %24 = vector.load %arg6[%c0_8, %c0_9] : memref<4x512xf32, #tpu.memory_space<vmem>>, vector<4x512xf32>
    tpu.vector_store %arg6[%c0_8, %c0_9], %23 {strides = array<i32>} : memref<4x512xf32, #tpu.memory_space<vmem>>, vector<4x512xf32>,
    %c0_10 = arith.constant 0 : index
    %c0_11 = arith.constant 0 : index
    %25 = vector.load %arg7[%c0_10, %c0_11] : memref<4x512xf32, #tpu.memory_space<vmem>>, vector<4x512xf32>
    %26 = arith.extui %15 : vector<4x512xi1> to vector<4x512xi32>
    %27 = arith.sitofp %26 : vector<4x512xi32> to vector<4x512xf32>
    %28 = arith.addf %25, %27 : vector<4x512xf32>
    %c0_12 = arith.constant 0 : index
    %c0_13 = arith.constant 0 : index
    %29 = vector.load %arg7[%c0_12, %c0_13] : memref<4x512xf32, #tpu.memory_space<vmem>>, vector<4x512xf32>
    tpu.vector_store %arg7[%c0_12, %c0_13], %28 {strides = array<i32>} : memref<4x512xf32, #tpu.memory_space<vmem>>, vector<4x512xf32>,
    %c0_i32_14 = arith.constant 0 : i32
    %30 = arith.cmpi eq, %arg1, %c0_i32_14 : i32
    %31 = arith.extui %30 : i1 to i32
    %c0_i32_15 = arith.constant 0 : i32
    %32 = arith.cmpi ne, %31, %c0_i32_15 : i32
    scf.if %32 {
      %c0_16 = arith.constant 0 : index
      %c0_17 = arith.constant 0 : index
      %33 = vector.load %arg6[%c0_16, %c0_17] : memref<4x512xf32, #tpu.memory_space<vmem>>, vector<4x512xf32>
      %34 = vector.shape_cast %33 : vector<4x512xf32> to vector<1x4x512xf32>
      %cst_18 = arith.constant dense<0.000000e+00> : vector<1xf32>
      %35 = vector.multi_reduction <add>, %34, %cst_18 [1, 2] : vector<1x4x512xf32> to vector<1xf32>
      %36 = vector.shape_cast %35 : vector<1xf32> to vector<1x1x1xf32>
      %37 = vector.extract %36[0, 0, 0] : f32 from vector<1x1x1xf32>
      %38 = vector.broadcast %37 : f32 to vector<1x8x128xf32>
      %c0_19 = arith.constant 0 : index
      %c0_20 = arith.constant 0 : index
      %c0_21 = arith.constant 0 : index
      %39 = vector.load %arg4[%c0_19, %c0_20, %c0_21] : memref<1x8x128xf32, #tpu.memory_space<vmem>>, vector<1x8x128xf32>
      tpu.vector_store %arg4[%c0_19, %c0_20, %c0_21], %38 {strides = array<i32>} : memref<1x8x128xf32, #tpu.memory_space<vmem>>, vector<1x8x128xf32>,
      %c0_22 = arith.constant 0 : index
      %c0_23 = arith.constant 0 : index
      %40 = vector.load %arg7[%c0_22, %c0_23] : memref<4x512xf32, #tpu.memory_space<vmem>>, vector<4x512xf32>
      %41 = vector.shape_cast %40 : vector<4x512xf32> to vector<1x4x512xf32>
      %cst_24 = arith.constant dense<0.000000e+00> : vector<1xf32>
      %42 = vector.multi_reduction <add>, %41, %cst_24 [1, 2] : vector<1x4x512xf32> to vector<1xf32>
      %43 = vector.shape_cast %42 : vector<1xf32> to vector<1x1x1xf32>
      %44 = vector.extract %43[0, 0, 0] : f32 from vector<1x1x1xf32>
      %45 = vector.broadcast %44 : f32 to vector<1x8x128xf32>
      %c0_25 = arith.constant 0 : index
      %c0_26 = arith.constant 0 : index
      %c0_27 = arith.constant 0 : index
      %46 = vector.load %arg5[%c0_25, %c0_26, %c0_27] : memref<1x8x128xf32, #tpu.memory_space<vmem>>, vector<1x8x128xf32>
      tpu.vector_store %arg5[%c0_25, %c0_26, %c0_27], %45 {strides = array<i32>} : memref<1x8x128xf32, #tpu.memory_space<vmem>>, vector<1x8x128xf32>,
    } else {
    }
    return
  }
  func.func @transform_0(%arg0: i32, %arg1: i32) -> (i32, i32) {
    %c1_i32 = arith.constant 1 : i32
    %0 = arith.muli %arg0, %c1_i32 : i32
    %1 = arith.addi %0, %arg1 : i32
    %c0_i32 = arith.constant 0 : i32
    %2 = arith.minsi %1, %c0_i32 : i32
    %c0_i32_0 = arith.constant 0 : i32
    %c0_i32_1 = arith.constant 0 : i32
    return %2, %c0_i32_0 : i32, i32
  }
  func.func @transform_1(%arg0: i32, %arg1: i32) -> (i32, i32) {
    %c1_i32 = arith.constant 1 : i32
    %0 = arith.muli %arg0, %c1_i32 : i32
    %1 = arith.addi %0, %arg1 : i32
    %c0_i32 = arith.constant 0 : i32
    %2 = arith.minsi %1, %c0_i32 : i32
    %c0_i32_0 = arith.constant 0 : i32
    %c0_i32_1 = arith.constant 0 : i32
    return %2, %c0_i32_0 : i32, i32
  }
  func.func @transform_2(%arg0: i32, %arg1: i32) -> (i32, i32, i32) {
    %c0_i32 = arith.constant 0 : i32
    %c0_i32_0 = arith.constant 0 : i32
    %c0_i32_1 = arith.constant 0 : i32
    return %arg0, %c0_i32, %c0_i32_0 : i32, i32, i32
  }
  func.func @transform_3(%arg0: i32, %arg1: i32) -> (i32, i32, i32) {
    %c0_i32 = arith.constant 0 : i32
    %c0_i32_0 = arith.constant 0 : i32
    %c0_i32_1 = arith.constant 0 : i32
    return %arg0, %c0_i32, %c0_i32_0 : i32, i32, i32
  }
}

</mosaic_0001>

<llo_original>
// kernel: inv_rmse.1
$region0: #{inv_rmse.1}
  #allocation0 [shape = 'u32[]', space=smem, size = 0x4, offset = 0x4, fixed_abs, tag = 'smem constant byte address 0x4 - core index']
  #allocation1 [shape = 'u32[144,128]{1,0:T(1,128)}', space=vmem, size = 0x12000, scoped, tag = 'internal scratch']
  #allocation2 [shape = 'f32[4,512]{1,0:T(4,128)}', space=vmem, size = 0x2000, scoped, tag = 'scratch operand']
  #allocation3 [shape = 'f32[4,512]{1,0:T(4,128)}', space=vmem, size = 0x2000, scoped, tag = 'scratch operand']
  %s0 = inlined_call_operand.vmem [shape: f32[4,512], index: 0, kind: input, shape index: {}]
  %s1 = inlined_call_operand.vmem [shape: f32[4,512], index: 1, kind: input, shape index: {}]
  %s2 = inlined_call_operand.vmem [shape: f32[2,8,128], index: 2, kind: output, shape index: {0}]
  %s3 = inlined_call_operand.vmem [shape: f32[2,8,128], index: 3, kind: output, shape index: {1}]
  %4 = xla_tuple %s2, %s3
  %s5 = sld [smem:[#allocation0]]
  $region57: #{inv_rmse.1} parent=0
    _
  %s7 = ssub.s32 1, %s5
  %s8 = scalar_select 0, %s7, %s5
  loop: start=0, step=1, limit=4
  $region2: #{inv_rmse.1} parent=0 // loop_pre_header
    _
  $region3: #{inv_rmse.1} parent=0 // loop_header
    %s10 = sphi 0, %s14
    %p11 = scmp.ge.s32.totalorder %s10, 4
    %s17 = sphi 0, %s29
    %s18 = sphi 0, %s25
    %s19 = sphi 0, %s17
    %s20 = sphi 0, %s18
    %s21 = sphi 0, %s19
    %s22 = sphi 0, %s20
    %s38 = sphi 0, %s40
    %s41 = sphi 0, %s38
    %s42 = sphi 0, %s41
    %s58 = sphi 0, %s42
    %s70 = sphi 0, %s72
    %s73 = sphi 0, %s70
    %s74 = sphi 0, %s73
    %s90 = sphi 0, %s74
    %s96 = sphi 0, %s98
    %s99 = sphi 0, %s96
    %s100 = sphi 0, %s99
    %s116 = sphi 0, %s100
    %s122 = sphi 0, %s124
    %s125 = sphi 0, %s122
    %s126 = sphi 0, %s125
    %s142 = sphi 0, %s126
  $region4: #{inv_rmse.1} parent=0 // loop_header_branch
    %13 = sbr.rel (%p11) target = $region8
  $region5: #{inv_rmse.1} parent=0 // loop_body
    %s15 = ssub.s32 %s10, 1
    %s16 = ssub.s32 %s10, 2
    %s23 = sadd.s32 1, %s18
    %p24 = scmp.ge.s32.totalorder %s23, 1
    %s25 = scalar_select %p24, 0, %s23
    %s26 = sadd.s32 1, %s17
    %s27 = scalar_select %p24, %s26, %s17
    %p28 = scmp.ge.s32.totalorder %s27, 2
    %s29 = scalar_select %p28, 0, %s27
    %s30 = sadd.s32 %s17, %s18
    %p31 = scmp.lt.s32.totalorder %s30, 0
    %s32 = scalar_select %p31, %s30, 0
    %s33 = sadd.s32 %s29, %s25
    %p34 = scmp.lt.s32.totalorder %s33, 0
    %s35 = scalar_select %p34, %s33, 0
    %s36 = ssub.s32 %s32, %s35
    %p37 = scmp.eq.s32.totalorder %s36, 0
    %s39 = sadd.s32 %s38, 1
    %s40 = scalar_select %p37, %s38, %s39
    %p43 = pneg %p37
    %p44 = scmp.eq.s32.totalorder %s10, 1
    %p45 = por %p43, %p44
    %p46 = scmp.ne.s32.totalorder %s38, %s41
    %p47 = scmp.eq.s32.totalorder %s10, 0
    %p48 = por %p46, %p47
    %p49 = scmp.ne.s32.totalorder %s38, %s41
    %p50 = scmp.eq.s32.totalorder %s15, 1
    %p51 = por %p49, %p50
    %p52 = scmp.ne.s32.totalorder %s41, %s42
    %p53 = scmp.eq.s32.totalorder %s15, 0
    %p54 = por %p52, %p53
    %p55 = scmp.ne.s32.totalorder %s41, %s42
    %p56 = scmp.eq.s32.totalorder %s16, 1
    %p57 = por %p55, %p56
    %p59 = scmp.ne.s32.totalorder %s42, %s58
    %p60 = scmp.eq.s32.totalorder %s16, 0
    %p61 = por %p59, %p60
    %s62 = sadd.s32 %s17, %s18
    %p63 = scmp.lt.s32.totalorder %s62, 0
    %s64 = scalar_select %p63, %s62, 0
    %s65 = sadd.s32 %s29, %s25
    %p66 = scmp.lt.s32.totalorder %s65, 0
    %s67 = scalar_select %p66, %s65, 0
    %s68 = ssub.s32 %s64, %s67
    %p69 = scmp.eq.s32.totalorder %s68, 0
    %s71 = sadd.s32 %s70, 1
    %s72 = scalar_select %p69, %s70, %s71
    %p75 = pneg %p69
    %p76 = scmp.eq.s32.totalorder %s10, 1
    %p77 = por %p75, %p76
    %p78 = scmp.ne.s32.totalorder %s70, %s73
    %p79 = scmp.eq.s32.totalorder %s10, 0
    %p80 = por %p78, %p79
    %p81 = scmp.ne.s32.totalorder %s70, %s73
    %p82 = scmp.eq.s32.totalorder %s15, 1
    %p83 = por %p81, %p82
    %p84 = scmp.ne.s32.totalorder %s73, %s74
    %p85 = scmp.eq.s32.totalorder %s15, 0
    %p86 = por %p84, %p85
    %p87 = scmp.ne.s32.totalorder %s73, %s74
    %p88 = scmp.eq.s32.totalorder %s16, 1
    %p89 = por %p87, %p88
    %p91 = scmp.ne.s32.totalorder %s74, %s90
    %p92 = scmp.eq.s32.totalorder %s16, 0
    %p93 = por %p91, %p92
    %s94 = ssub.s32 %s17, %s29
    %p95 = scmp.eq.s32.totalorder %s94, 0
    %s97 = sadd.s32 %s96, 1
    %s98 = scalar_select %p95, %s96, %s97
    %p101 = pneg %p95
    %p102 = scmp.eq.s32.totalorder %s10, 1
    %p103 = por %p101, %p102
    %p104 = scmp.ne.s32.totalorder %s96, %s99
    %p105 = scmp.eq.s32.totalorder %s10, 0
    %p106 = por %p104, %p105
    %p107 = scmp.ne.s32.totalorder %s96, %s99
    %p108 = scmp.eq.s32.totalorder %s15, 1
    %p109 = por %p107, %p108
    %p110 = scmp.ne.s32.totalorder %s99, %s100
    %p111 = scmp.eq.s32.totalorder %s15, 0
    %p112 = por %p110, %p111
    %p113 = scmp.ne.s32.totalorder %s99, %s100
    %p114 = scmp.eq.s32.totalorder %s16, 1
    %p115 = por %p113, %p114
    %p117 = scmp.ne.s32.totalorder %s100, %s116
    %p118 = scmp.eq.s32.totalorder %s16, 0
    %p119 = por %p117, %p118
    %s120 = ssub.s32 %s17, %s29
    %p121 = scmp.eq.s32.totalorder %s120, 0
    %s123 = sadd.s32 %s122, 1
    %s124 = scalar_select %p121, %s122, %s123
    %p127 = pneg %p121
    %p128 = scmp.eq.s32.totalorder %s10, 1
    %p129 = por %p127, %p128
    %p130 = scmp.ne.s32.totalorder %s122, %s125
    %p131 = scmp.eq.s32.totalorder %s10, 0
    %p132 = por %p130, %p131
    %p133 = scmp.ne.s32.totalorder %s122, %s125
    %p134 = scmp.eq.s32.totalorder %s15, 1
    %p135 = por %p133, %p134
    %p136 = scmp.ne.s32.totalorder %s125, %s126
    %p137 = scmp.eq.s32.totalorder %s15, 0
    %p138 = por %p136, %p137
    %p139 = scmp.ne.s32.totalorder %s125, %s126
    %p140 = scmp.eq.s32.totalorder %s16, 1
    %p141 = por %p139, %p140
    %p143 = scmp.ne.s32.totalorder %s126, %s142
    %p144 = scmp.eq.s32.totalorder %s16, 0
    %p145 = por %p143, %p144
    %p146 = scmp.le.s32.totalorder 1, %s10
    %p147 = scmp.lt.s32.totalorder %s10, 3
    %p148 = pnand %p146, %p147
    %p149 = pneg %p148
    // Predicated region
    $region9: #{inv_rmse.1} parent=5 // pred_check
      _
    $region10: #{inv_rmse.1} parent=5 // pred_check_branch
      %151 = sbr.rel (%p148) target = $region12
    $region11: #{inv_rmse.1} parent=5 // pred_region
      %s152 = ssub.s32 %s10, 1
    $region12: #{inv_rmse.1} parent=5 // pred_fallthru
      _
    %p153 = scmp.lt.s32.totalorder %s10, 2
    // Predicated region
    $region13: #{inv_rmse.1} parent=5 // pred_check
      %p154 = pneg %p153
    $region14: #{inv_rmse.1} parent=5 // pred_check_branch
      %156 = sbr.rel (%p154) target = $region16
    $region15: #{inv_rmse.1} parent=5 // pred_region
      // Predicated region
      $region17: #{inv_rmse.1} parent=15 // pred_check
        %p157 = pneg %p48
      $region18: #{inv_rmse.1} parent=15 // pred_check_branch
        %159 = sbr.rel (%p157) target = $region20
      $region19: #{inv_rmse.1} parent=15 // pred_region
        %s160 = sadd.s32 %s17, %s18
        %p161 = scmp.lt.s32.totalorder %s160, 0
        %s162 = scalar_select %p161, %s160, 0
        %p163 = scmp.lt.s32.totalorder %s162, 0
        %s164 = scalar_select %p163, %s162, 0
        %s165 = smul.addr %s164, 4
        %s166 = smul.addr %s165, 4
        %s167 = scalar_lea.vmem %s0, %s166
        %s168 = sadd.s32 %s17, %s18
        %p169 = scmp.lt.s32.totalorder %s168, 0
        %s170 = scalar_select %p169, %s168, 0
      $region20: #{inv_rmse.1} parent=15 // pred_fallthru
        _
      // Predicated region
      $region21: #{inv_rmse.1} parent=15 // pred_check
        %p171 = pneg %p80
      $region22: #{inv_rmse.1} parent=15 // pred_check_branch
        %173 = sbr.rel (%p171) target = $region24
      $region23: #{inv_rmse.1} parent=15 // pred_region
        %s174 = sadd.s32 %s17, %s18
        %p175 = scmp.lt.s32.totalorder %s174, 0
        %s176 = scalar_select %p175, %s174, 0
        %p177 = scmp.lt.s32.totalorder %s176, 0
        %s178 = scalar_select %p177, %s176, 0
        %s179 = smul.addr %s178, 4
        %s180 = smul.addr %s179, 4
        %s181 = scalar_lea.vmem %s1, %s180
        %s182 = sadd.s32 %s17, %s18
        %p183 = scmp.lt.s32.totalorder %s182, 0
        %s184 = scalar_select %p183, %s182, 0
      $region24: #{inv_rmse.1} parent=15 // pred_fallthru
        _
    $region16: #{inv_rmse.1} parent=5 // pred_fallthru
      _
    %p185 = scmp.le.s32.totalorder 1, %s10
    %p186 = scmp.lt.s32.totalorder %s10, 3
    %p187 = pnand %p185, %p186
    %p188 = pneg %p187
    // Predicated region
    $region25: #{inv_rmse.1} parent=5 // pred_check
      _
    $region26: #{inv_rmse.1} parent=5 // pred_check_branch
      %190 = sbr.rel (%p187) target = $region28
    $region27: #{inv_rmse.1} parent=5 // pred_region
      %s191 = ssub.s32 %s10, 1
      %s192 = sadd.s32 %s19, %s20
      %p193 = scmp.lt.s32.totalorder %s192, 0
      %s194 = scalar_select %p193, %s192, 0
      %p195 = scmp.lt.s32.totalorder %s194, 0
      %s196 = scalar_select %p195, %s194, 0
      %s197 = smul.addr %s196, 4
      %s198 = smul.addr %s197, 4
      %s199 = scalar_lea.vmem %s0, %s198
      %p200 = pneg %p54
      %p201 = pneg %p51
      %s202 = sadd.s32 %s19, %s20
      %p203 = scmp.lt.s32.totalorder %s202, 0
      %s204 = scalar_select %p203, %s202, 0
      %p205 = scmp.lt.s32.totalorder %s204, 0
      %s206 = scalar_select %p205, %s204, 0
      %s207 = smul.addr %s206, 4
      %s208 = smul.addr %s207, 4
      %s209 = scalar_lea.vmem %s1, %s208
      %p210 = pneg %p86
      %p211 = pneg %p83
      %p212 = pneg %p112
      %p213 = pneg %p109
      %p214 = scmp.lt.s32.totalorder %s19, 1
      %s215 = scalar_select %p214, %s19, 1
      %s216 = smul.addr %s215, 8
      %s217 = scalar_lea.vmem %s2, %s216
      %p218 = pneg %p138
      %p219 = pneg %p135
      %p220 = scmp.lt.s32.totalorder %s19, 1
      %s221 = scalar_select %p220, %s19, 1
      %s222 = smul.addr %s221, 8
      %s223 = scalar_lea.vmem %s3, %s222
      %s224 = sadd.s32 %s19, %s20
      %p225 = scmp.lt.s32.totalorder %s224, 0
      %s226 = scalar_select %p225, %s224, 0
      %p227 = scmp.lt.s32.totalorder %s226, 0
      %s228 = scalar_select %p227, %s226, 0
      %s229 = smul.addr %s228, 4
      %s230 = smul.addr %s229, 4
      %s231 = scalar_lea.vmem %s0, %s230
      %s232 = sadd.s32 %s19, %s20
      %p233 = scmp.lt.s32.totalorder %s232, 0
      %s234 = scalar_select %p233, %s232, 0
      %s235 = sadd.s32 %s19, %s20
      %p236 = scmp.lt.s32.totalorder %s235, 0
      %s237 = scalar_select %p236, %s235, 0
      %p238 = scmp.lt.s32.totalorder %s237, 0
      %s239 = scalar_select %p238, %s237, 0
      %s240 = smul.addr %s239, 4
      %s241 = smul.addr %s240, 4
      %s242 = scalar_lea.vmem %s1, %s241
      %s243 = sadd.s32 %s19, %s20
      %p244 = scmp.lt.s32.totalorder %s243, 0
      %s245 = scalar_select %p244, %s243, 0
      %p246 = scmp.lt.s32.totalorder %s19, 1
      %s247 = scalar_select %p246, %s19, 1
      %s248 = smul.addr %s247, 8
      %s249 = scalar_lea.vmem %s2, %s248
      %p250 = scmp.lt.s32.totalorder %s19, 1
      %s251 = scalar_select %p250, %s19, 1
      %s252 = smul.addr %s251, 8
      %s253 = scalar_lea.vmem %s3, %s252
      %p254 = scmp.eq.s32.totalorder %s20, 0
      // Predicated region
      $region29: #{inv_rmse.1} parent=27 // pred_check
        %p255 = pneg %p254
      $region30: #{inv_rmse.1} parent=27 // pred_check_branch
        %257 = sbr.rel (%p255) target = $region32
      $region31: #{inv_rmse.1} parent=27 // pred_region
        %258 = vst [vmem:[#allocation2] sm:$0xff] 0.0
        %259 = vst [vmem:[#allocation2 + $0x8] sm:$0xff] 0.0
        %260 = vst [vmem:[#allocation3] sm:$0xff] 0.0
        %261 = vst [vmem:[#allocation3 + $0x8] sm:$0xff] 0.0
      $region32: #{inv_rmse.1} parent=27 // pred_fallthru
        _
      %v262 = vld [vmem:[%s231] sm:$0xff]
      %v263 = vld [vmem:[%s231 + $0x8] sm:$0xff]
      %v264 = vld [vmem:[%s242] sm:$0xff]
      %v265 = vld [vmem:[%s242 + $0x8] sm:$0xff]
      %vm266 = vcmp.gt.f32.partialorder %v264, 0.0
      %vm267 = vcmp.gt.f32.partialorder %v265, 0.0
      %s268 = sadd.s32 %s19, %s20
      %s269 = smul.u32 %s268, 4
      %v270 = vlaneseq
      %v271 = vshrl.u32 %v270, 7
      %v272 = vstv %s269
      %v273 = vadd.s32 %v272, %v271
      %vm274 = vcmp.lt.s32.totalorder %v273, 4
      %v275 = vsel %vm274, 1, 0
      %v277 = vunpack.c.l.s4 839922192
      %v278 = vunpack.c.0.s8 %v277
      %v279 = vlaneseq
      %v280 = vshrl.u32 %v279, 7
      %v281 = vsub.s32 %v278, %v280
      %v282 = vrot.slane %v275, %v281
      %vm283 = vcmp.ne.s32.totalorder %v282, 0
      %vm284 = vmand %vm266, %vm283
      %vm285 = vmand %vm267, %vm283
      %v286 = vsub.f32 %v264, %v262
      %v287 = vsub.f32 %v265, %v263
      %v288 = vmul.f32 %v262, %v264
      %v289 = vmul.f32 %v263, %v265
      %v290 = vrcp.pop %v288
      %v291 = vmul.f32 %v286, %v290
      %v292 = vrcp.pop %v289
      %v293 = vmul.f32 %v287, %v292
      %v294 = vsel %vm284, %v291, 0.0
      %v295 = vsel %vm285, %v293, 0.0
      %v296 = vld [vmem:[#allocation2] sm:$0xff]
      %v297 = vld [vmem:[#allocation2 + $0x8] sm:$0xff]
      %v298 = vmul.f32 %v294, %v294
      %v299 = vmul.f32 %v295, %v295
      %v300 = vadd.f32 %v296, %v298
      %v301 = vadd.f32 %v297, %v299
      %302 = vst [vmem:[#allocation2] sm:$0xff] %v300
      %303 = vst [vmem:[#allocation2 + $0x8] sm:$0xff] %v301
      %v304 = vld [vmem:[#allocation3] sm:$0xff]
      %v305 = vld [vmem:[#allocation3 + $0x8] sm:$0xff]
      %v306 = vsel %vm284, 1, 0
      %v307 = vsel %vm285, 1, 0
      %v308 = vcvt.s32.f32 %v306
      %v309 = vcvt.s32.f32 %v307
      %v310 = vadd.f32 %v304, %v308
      %v311 = vadd.f32 %v305, %v309
      %312 = vst [vmem:[#allocation3] sm:$0xff] %v310
      %313 = vst [vmem:[#allocation3 + $0x8] sm:$0xff] %v311
      // Predicated region
      $region33: #{inv_rmse.1} parent=27 // pred_check
        %p314 = pneg %p254
      $region34: #{inv_rmse.1} parent=27 // pred_check_branch
        %316 = sbr.rel (%p314) target = $region36
      $region35: #{inv_rmse.1} parent=27 // pred_region
        %v317 = vld [vmem:[#allocation2] sm:$0xff]
        %v318 = vld [vmem:[#allocation2 + $0x8] sm:$0xff]
        %v321 = vcombine.high %v317, %v317
        %v322 = vcombine.high %v318, %v318
        %vm325 = vcmask 1043456
        %v326 = vsel %vm325, %v317, 0.0
        %v327 = vsel %vm325, %v321, 0.0
        %v328 = vadd.f32 %v326, %v327
        %v329 = vsel %vm325, %v318, 0.0
        %v330 = vadd.f32 %v328, %v329
        %v331 = vsel %vm325, %v322, 0.0
        %v332 = vadd.f32 %v330, %v331
        %333 = vadd.xlane.f32.xlu0 %v332
        %v334 = vpop.xlane.xlu0 %333
        %v335 = vrot.slane %v334, 4
        %v336 = vadd.f32 %v334, %v335
        %v337 = vrot.slane %v336, 2
        %v338 = vadd.f32 %v336, %v337
        %v339 = vrot.slane %v338, 1
        %v340 = vadd.f32 %v338, %v339
        %s341 = vtos %v340
        %v342 = vstv %s341
        %343 = vst [vmem:[%s249] sm:$0xff] %v342
        %v344 = vld [vmem:[#allocation3] sm:$0xff]
        %v345 = vld [vmem:[#allocation3 + $0x8] sm:$0xff]
        %v348 = vcombine.high %v344, %v344
        %v349 = vcombine.high %v345, %v345
        %v352 = vsel %vm325, %v344, 0.0
        %v353 = vsel %vm325, %v348, 0.0
        %v354 = vadd.f32 %v352, %v353
        %v355 = vsel %vm325, %v345, 0.0
        %v356 = vadd.f32 %v354, %v355
        %v357 = vsel %vm325, %v349, 0.0
        %v358 = vadd.f32 %v356, %v357
        %359 = vadd.xlane.f32.xlu0 %v358
        %v360 = vpop.xlane.xlu0 %359
        %v361 = vrot.slane %v360, 4
        %v362 = vadd.f32 %v360, %v361
        %v363 = vrot.slane %v362, 2
        %v364 = vadd.f32 %v362, %v363
        %v365 = vrot.slane %v364, 1
        %v366 = vadd.f32 %v364, %v365
        %s367 = vtos %v366
        %v368 = vstv %s367
        %369 = vst [vmem:[%s253] sm:$0xff] %v368
      $region36: #{inv_rmse.1} parent=27 // pred_fallthru
        _
      %p370 = scmp.lt.s32.totalorder %s19, 1
      %s371 = scalar_select %p370, %s19, 1
      %s372 = smul.addr %s371, 8
      %s373 = scalar_lea.vmem %s2, %s372
      %p374 = scmp.lt.s32.totalorder %s19, 1
      %s375 = scalar_select %p374, %s19, 1
      %s376 = smul.addr %s375, 8
      %s377 = scalar_lea.vmem %s3, %s376
      // Predicated region
      $region37: #{inv_rmse.1} parent=27 // pred_check
        %p378 = pneg %p109
      $region38: #{inv_rmse.1} parent=27 // pred_check_branch
        %380 = sbr.rel (%p378) target = $region40
      $region39: #{inv_rmse.1} parent=27 // pred_region
        _
      $region40: #{inv_rmse.1} parent=27 // pred_fallthru
        _
      // Predicated region
      $region41: #{inv_rmse.1} parent=27 // pred_check
        %p381 = pneg %p135
      $region42: #{inv_rmse.1} parent=27 // pred_check_branch
        %383 = sbr.rel (%p381) target = $region44
      $region43: #{inv_rmse.1} parent=27 // pred_region
        _
      $region44: #{inv_rmse.1} parent=27 // pred_fallthru
        _
    $region28: #{inv_rmse.1} parent=5 // pred_fallthru
      _
    %p384 = scmp.le.s32.totalorder 2, %s10
    // Predicated region
    $region45: #{inv_rmse.1} parent=5 // pred_check
      %p385 = pneg %p384
    $region46: #{inv_rmse.1} parent=5 // pred_check_branch
      %387 = sbr.rel (%p385) target = $region48
    $region47: #{inv_rmse.1} parent=5 // pred_region
      %s388 = ssub.s32 %s10, 2
      // Predicated region
      $region49: #{inv_rmse.1} parent=47 // pred_check
        %p389 = pneg %p115
      $region50: #{inv_rmse.1} parent=47 // pred_check_branch
        %391 = sbr.rel (%p389) target = $region52
      $region51: #{inv_rmse.1} parent=47 // pred_region
        %p392 = scmp.lt.s32.totalorder %s21, 1
        %s393 = scalar_select %p392, %s21, 1
        %s394 = smul.addr %s393, 8
        %s395 = scalar_lea.vmem %s2, %s394
      $region52: #{inv_rmse.1} parent=47 // pred_fallthru
        _
      // Predicated region
      $region53: #{inv_rmse.1} parent=47 // pred_check
        %p396 = pneg %p141
      $region54: #{inv_rmse.1} parent=47 // pred_check_branch
        %398 = sbr.rel (%p396) target = $region56
      $region55: #{inv_rmse.1} parent=47 // pred_region
        %p399 = scmp.lt.s32.totalorder %s21, 1
        %s400 = scalar_select %p399, %s21, 1
        %s401 = smul.addr %s400, 8
        %s402 = scalar_lea.vmem %s3, %s401
      $region56: #{inv_rmse.1} parent=47 // pred_fallthru
        _
    $region48: #{inv_rmse.1} parent=5 // pred_fallthru
      _
  $region6: #{inv_rmse.1} parent=0 // loop_footer
    %s14 = sadd.s32 1, %s10
  $region7: #{inv_rmse.1} parent=0 // loop_footer_branch
    %9 = sbr.rel target = $region3
  $region8: #{inv_rmse.1} parent=0 // loop_exit
    _

</llo_original>
